<compile_context>
chip_gen: v7x
topology: tpu7x:2x2x1
jax: 0.10.0
libtpu: 0.0.40
codegen_flags: <defaults>
</compile_context>

<pallas_src>
import functools

import numpy as np
import jax
import jax.numpy as jnp
from jax import lax
from jax.experimental import pallas as pl
from jax.experimental.pallas import tpu as pltpu

MAX_ITER = 20
EPSILON = 1e-10


# ---------------------------------------------------------------------------
# Packed path: small matrices, batch folded into lanes -> (M, B*N) slab.
# ---------------------------------------------------------------------------
def _sinkhorn_packed_kernel(x_ref, bd_ref, out_ref, *, max_iter, epsilon, exp,
                            exp_alpha):
    x = x_ref[...].astype(jnp.float32) + epsilon        # (M, B*N), lane-dense
    bd = bd_ref[...]                                    # (B*N, B*N) bf16 block-diag ones

    def row_sums(v):
        # Per-(batch, row) sums replicated across that batch's N lanes, done on
        # the otherwise idle MXU.  hi/lo bf16 split => f32-accurate sums
        # irrespective of the MXU's native matmul precision.
        hi = v.astype(jnp.bfloat16)
        lo = (v - hi.astype(jnp.float32)).astype(jnp.bfloat16)
        return (jnp.dot(hi, bd, preferred_element_type=jnp.float32) +
                jnp.dot(lo, bd, preferred_element_type=jnp.float32))

    # Tiny block (a couple of vregs): full static unroll keeps every dependence
    # chain visible to the scheduler without register-pressure concerns.
    for i in range(max_iter):
        if exp:
            # Mirrors the torch source, which re-exponentiates inside every
            # iteration (default exp=False leaves this path off).
            x = jnp.exp(exp_alpha * x)
        if i % 2 == 1:
            denom = row_sums(x)                          # (M, B*N), MXU
        else:
            denom = jnp.sum(x, axis=0, keepdims=True)    # (1, B*N) column sums, XLU
        if i == max_iter - 1:
            x = x / denom          # exact reciprocal on the final normalization
        else:
            x = x * pl.reciprocal(denom, approx=True)    # EUP, off the VALU path
    out_ref[...] = x.astype(out_ref.dtype)


def _sinkhorn_packed(s, *, max_iter, epsilon, exp, exp_alpha):
    B, M, N = s.shape
    G = B * N
    # Lane-dense repack (wrapper-side layout plumbing): (B, M, N) -> (M, B*N).
    x = jnp.transpose(s, (1, 0, 2)).reshape(M, G)
    # Block-diagonal ones: one NxN ones block per batch element (exact in bf16).
    bd = jnp.kron(jnp.eye(B, dtype=jnp.float32),
                  jnp.ones((N, N), jnp.float32)).astype(jnp.bfloat16)
    kernel = functools.partial(_sinkhorn_packed_kernel, max_iter=max_iter,
                               epsilon=epsilon, exp=exp, exp_alpha=exp_alpha)
    out = pl.pallas_call(
        kernel,
        out_shape=jax.ShapeDtypeStruct((M, G), s.dtype),
        grid=(1,),                      # single step: whole problem lives in VMEM
        in_specs=[pl.BlockSpec((M, G), lambda i: (0, 0)),
                  pl.BlockSpec((G, G), lambda i: (0, 0))],
        out_specs=pl.BlockSpec((M, G), lambda i: (0, 0)),
        compiler_params=pltpu.CompilerParams(
            dimension_semantics=("arbitrary",)),
    )(x, bd)
    return jnp.transpose(out.reshape(M, B, N), (1, 0, 2))


# ---------------------------------------------------------------------------
# General path: batch-blocked, VMEM-budgeted (already lane-dense for N >= 128).
# ---------------------------------------------------------------------------
def _sinkhorn_batched_kernel(s_ref, out_ref, *, max_iter, epsilon, exp,
                             exp_alpha, unroll):
    x = s_ref[...].astype(jnp.float32) + epsilon         # (Bt, M, N)

    def norm_col(x):
        if exp:
            x = jnp.exp(exp_alpha * x)
        col = jnp.sum(x, axis=1, keepdims=True)          # (Bt, 1, N)
        return x * pl.reciprocal(col, approx=True)

    def norm_row(x, exact):
        if exp:
            x = jnp.exp(exp_alpha * x)
        row = jnp.sum(x, axis=2, keepdims=True)          # (Bt, M, 1)
        return x / row if exact else x * pl.reciprocal(row, approx=True)

    n_pairs, rem = divmod(max_iter, 2)
    if rem:                                # odd max_iter: ends on a column step
        if n_pairs:
            x = lax.fori_loop(0, n_pairs,
                              lambda _, x: norm_row(norm_col(x), False), x,
                              unroll=unroll)
        if exp:
            x = jnp.exp(exp_alpha * x)
        x = x / jnp.sum(x, axis=1, keepdims=True)        # exact final normalize
    elif n_pairs:
        if n_pairs > 1:
            x = lax.fori_loop(0, n_pairs - 1,
                              lambda _, x: norm_row(norm_col(x), False), x,
                              unroll=unroll)
        x = norm_row(norm_col(x), True)                  # exact final normalize
    out_ref[...] = x.astype(out_ref.dtype)


def _vmem_capacity_bytes():
    # Per-generation VMEM: v5e/v6e have 128 MiB, v7x only 64 MiB per core.
    try:
        return int(pltpu.get_tpu_info().vmem_capacity_bytes)
    except Exception:
        return 64 << 20                    # conservative default (v7x-sized)


def _sinkhorn_batched(s, *, max_iter, epsilon, exp, exp_alpha):
    B, M, N = s.shape
    cap = _vmem_capacity_bytes()
    budget = max(8 << 20, cap // 4)
    # in + out double-buffered at f32 (16 B/elem) + live working value (4 B/elem).
    bytes_per_batch = 20 * M * N
    max_bt = max(1, budget // bytes_per_batch)
    bt = 1
    for d in range(1, B + 1):              # largest divisor of B within budget
        if B % d == 0 and d <= max_bt:
            bt = d
    if M * N * 4 > (256 << 10):            # one matrix already >> the vreg file:
        bt = 1                             # extra chains only add VMEM traffic
    # TODO(synk): matrices too large for VMEM even at block_batch=1 would need
    # an in-matrix multi-pass reduction scheme; not implemented.
    unroll = (bt * M * N * 4) <= (16 << 10)
    vmem_limit = int(min(cap // 2, max(32 << 20, bt * bytes_per_batch + (16 << 20))))
    kernel = functools.partial(_sinkhorn_batched_kernel, max_iter=max_iter,
                               epsilon=epsilon, exp=exp, exp_alpha=exp_alpha,
                               unroll=unroll)
    return pl.pallas_call(
        kernel,
        out_shape=jax.ShapeDtypeStruct((B, M, N), s.dtype),
        grid=(B // bt,),
        in_specs=[pl.BlockSpec((bt, M, N), lambda b: (b, 0, 0))],
        out_specs=pl.BlockSpec((bt, M, N), lambda b: (b, 0, 0)),
        compiler_params=pltpu.CompilerParams(
            dimension_semantics=("parallel",),
            vmem_limit_bytes=vmem_limit),
    )(s)


# ---------------------------------------------------------------------------
# Public entry point + reference.
# ---------------------------------------------------------------------------
def sinkhorn_forward(s, *, max_iter=MAX_ITER, epsilon=EPSILON, exp=False,
                     exp_alpha=20.0):
    """Pallas forward of Sinkhorn(max_iter, epsilon)(s) with default args."""
    # TODO(synk): per-batch nrows/ncols masking and the dummy_row padding path
    # (module defaults None/False) are not implemented; they need per-batch
    # iota masks driven by scalar-prefetched lengths.
    B, M, N = s.shape
    if N < 128 and M <= 256 and B * N <= 1024:
        return _sinkhorn_packed(s, max_iter=max_iter, epsilon=epsilon,
                                exp=exp, exp_alpha=exp_alpha)
    return _sinkhorn_batched(s, max_iter=max_iter, epsilon=epsilon,
                             exp=exp, exp_alpha=exp_alpha)


def sinkhorn_reference(s, *, max_iter=MAX_ITER, epsilon=EPSILON, exp=False,
                       exp_alpha=20.0):
    """Pure-JAX mirror of the torch mul+sum formulation (nrows=ncols=None).

    With full slices row_norm_ones/col_norm_ones are all-ones, so the ones-
    matmuls reduce exactly to keepdims sums (computed exactly here).
    """
    s = s.astype(jnp.float32) + epsilon
    for i in range(max_iter):
        if exp:
            s = jnp.exp(exp_alpha * s)
        if i % 2 == 1:
            ssum = jnp.sum(s, axis=2, keepdims=True)     # == s @ ones(N,N)
        else:
            ssum = jnp.sum(s, axis=1, keepdims=True)     # == ones(M,M) @ s
        s = s / ssum
    return s


if __name__ == "__main__":
    key = jax.random.PRNGKey(0)
    k1, k2 = jax.random.split(key)

    # Case 1: small square similarity matrices -> packed lane-dense path
    # (B*N = 128 lanes, single grid step, MXU block-diagonal row sums).
    B, N = 8, 16
    s_small = jax.random.uniform(k1, (B, N, N), jnp.float32,
                                 minval=0.05, maxval=1.0)
    out_small = jax.block_until_ready(jax.jit(sinkhorn_forward)(s_small))
    assert out_small.shape == (B, N, N) and out_small.dtype == s_small.dtype
    assert bool(jnp.all(jnp.isfinite(out_small)))
    ref_small = sinkhorn_reference(s_small)
    np.testing.assert_allclose(np.asarray(out_small), np.asarray(ref_small),
                               rtol=1e-2, atol=1e-7)
    # After the final (exact-reciprocal) row normalization every row sums to 1.
    np.testing.assert_allclose(np.asarray(jnp.sum(out_small, axis=-1)),
                               np.ones((B, N), np.float32), atol=1e-4)

    # Case 2: larger square matrices (already lane-dense) -> batched fallback
    # path with the VMEM-aware block_batch heuristic (odd batch of 3).
    B2, N2 = 3, 128
    s_big = jax.random.uniform(k2, (B2, N2, N2), jnp.float32,
                               minval=0.05, maxval=1.0)
    out_big = jax.block_until_ready(jax.jit(sinkhorn_forward)(s_big))
    assert out_big.shape == (B2, N2, N2) and out_big.dtype == s_big.dtype
    ref_big = sinkhorn_reference(s_big)
    np.testing.assert_allclose(np.asarray(out_big), np.asarray(ref_big),
                               rtol=1e-2, atol=1e-7)
    np.testing.assert_allclose(np.asarray(jnp.sum(out_big, axis=-1)),
                               np.ones((B2, N2), np.float32), atol=1e-4)

    print("KERNEL_OK")
</pallas_src>

<mosaic_0001>
module attributes {stable_mosaic.version = 11 : i64} {
  func.func @_sinkhorn_packed_kernel(%arg0: i32, %arg1: memref<16x128xf32, #tpu.memory_space<vmem>>, %arg2: memref<128x128xbf16, #tpu.memory_space<vmem>>, %arg3: memref<16x128xf32, #tpu.memory_space<vmem>>) attributes {dimension_semantics = [#tpu.dimension_semantics<arbitrary>], iteration_bounds = array<i64: 1>, scalar_prefetch = 0 : i64, scratch_operands = 0 : i64, tpu.core_type = #tpu.core_type<tc>, window_params = [{pipeline_mode = #tpu.pipeline_mode<synchronous>, transform_indices = @transform_0, window_bounds = array<i64: 16, 128>}, {pipeline_mode = #tpu.pipeline_mode<synchronous>, transform_indices = @transform_1, window_bounds = array<i64: 128, 128>}, {pipeline_mode = #tpu.pipeline_mode<synchronous>, transform_indices = @transform_2, window_bounds = array<i64: 16, 128>}]} {
    %c0 = arith.constant 0 : index
    %c0_0 = arith.constant 0 : index
    %0 = vector.load %arg1[%c0, %c0_0] : memref<16x128xf32, #tpu.memory_space<vmem>>, vector<16x128xf32>
    %cst = arith.constant 1.000000e-10 : f32
    %1 = vector.broadcast %cst : f32 to vector<16x128xf32>
    %2 = arith.addf %0, %1 : vector<16x128xf32>
    %c0_1 = arith.constant 0 : index
    %c0_2 = arith.constant 0 : index
    %3 = vector.load %arg2[%c0_1, %c0_2] : memref<128x128xbf16, #tpu.memory_space<vmem>>, vector<128x128xbf16>
    %cst_3 = arith.constant dense<0.000000e+00> : vector<128xf32>
    %4 = vector.multi_reduction <add>, %2, %cst_3 [0] : vector<16x128xf32> to vector<128xf32>
    %5 = vector.shape_cast %4 : vector<128xf32> to vector<1x128xf32>
    %6 = tpu.reciprocal %5 {approx = true} : vector<1x128xf32> -> vector<1x128xf32>
    %7 = vector.broadcast %6 : vector<1x128xf32> to vector<16x128xf32>
    %8 = arith.mulf %2, %7 : vector<16x128xf32>
    %9 = arith.truncf %8 : vector<16x128xf32> to vector<16x128xbf16>
    %10 = arith.extf %9 : vector<16x128xbf16> to vector<16x128xf32>
    %11 = arith.subf %8, %10 : vector<16x128xf32>
    %12 = arith.truncf %11 : vector<16x128xf32> to vector<16x128xbf16>
    %cst_4 = arith.constant dense<0.000000e+00> : vector<16x128xf32>
    %13 = tpu.matmul %9, %3, %cst_4 {dimension_numbers = #tpu.dot_dimension_numbers<[1], [0], [0], [1], [0, 0, 1, 1], [], []>} : vector<16x128xbf16>, vector<128x128xbf16>, vector<16x128xf32> -> vector<16x128xf32>
    %cst_5 = arith.constant dense<0.000000e+00> : vector<16x128xf32>
    %14 = tpu.matmul %12, %3, %cst_5 {dimension_numbers = #tpu.dot_dimension_numbers<[1], [0], [0], [1], [0, 0, 1, 1], [], []>} : vector<16x128xbf16>, vector<128x128xbf16>, vector<16x128xf32> -> vector<16x128xf32>
    %15 = arith.addf %13, %14 : vector<16x128xf32>
    %16 = tpu.reciprocal %15 {approx = true} : vector<16x128xf32> -> vector<16x128xf32>
    %17 = arith.mulf %8, %16 : vector<16x128xf32>
    %cst_6 = arith.constant dense<0.000000e+00> : vector<128xf32>
    %18 = vector.multi_reduction <add>, %17, %cst_6 [0] : vector<16x128xf32> to vector<128xf32>
    %19 = vector.shape_cast %18 : vector<128xf32> to vector<1x128xf32>
    %20 = tpu.reciprocal %19 {approx = true} : vector<1x128xf32> -> vector<1x128xf32>
    %21 = vector.broadcast %20 : vector<1x128xf32> to vector<16x128xf32>
    %22 = arith.mulf %17, %21 : vector<16x128xf32>
    %23 = arith.truncf %22 : vector<16x128xf32> to vector<16x128xbf16>
    %24 = arith.extf %23 : vector<16x128xbf16> to vector<16x128xf32>
    %25 = arith.subf %22, %24 : vector<16x128xf32>
    %26 = arith.truncf %25 : vector<16x128xf32> to vector<16x128xbf16>
    %cst_7 = arith.constant dense<0.000000e+00> : vector<16x128xf32>
    %27 = tpu.matmul %23, %3, %cst_7 {dimension_numbers = #tpu.dot_dimension_numbers<[1], [0], [0], [1], [0, 0, 1, 1], [], []>} : vector<16x128xbf16>, vector<128x128xbf16>, vector<16x128xf32> -> vector<16x128xf32>
    %cst_8 = arith.constant dense<0.000000e+00> : vector<16x128xf32>
    %28 = tpu.matmul %26, %3, %cst_8 {dimension_numbers = #tpu.dot_dimension_numbers<[1], [0], [0], [1], [0, 0, 1, 1], [], []>} : vector<16x128xbf16>, vector<128x128xbf16>, vector<16x128xf32> -> vector<16x128xf32>
    %29 = arith.addf %27, %28 : vector<16x128xf32>
    %30 = tpu.reciprocal %29 {approx = true} : vector<16x128xf32> -> vector<16x128xf32>
    %31 = arith.mulf %22, %30 : vector<16x128xf32>
    %cst_9 = arith.constant dense<0.000000e+00> : vector<128xf32>
    %32 = vector.multi_reduction <add>, %31, %cst_9 [0] : vector<16x128xf32> to vector<128xf32>
    %33 = vector.shape_cast %32 : vector<128xf32> to vector<1x128xf32>
    %34 = tpu.reciprocal %33 {approx = true} : vector<1x128xf32> -> vector<1x128xf32>
    %35 = vector.broadcast %34 : vector<1x128xf32> to vector<16x128xf32>
    %36 = arith.mulf %31, %35 : vector<16x128xf32>
    %37 = arith.truncf %36 : vector<16x128xf32> to vector<16x128xbf16>
    %38 = arith.extf %37 : vector<16x128xbf16> to vector<16x128xf32>
    %39 = arith.subf %36, %38 : vector<16x128xf32>
    %40 = arith.truncf %39 : vector<16x128xf32> to vector<16x128xbf16>
    %cst_10 = arith.constant dense<0.000000e+00> : vector<16x128xf32>
    %41 = tpu.matmul %37, %3, %cst_10 {dimension_numbers = #tpu.dot_dimension_numbers<[1], [0], [0], [1], [0, 0, 1, 1], [], []>} : vector<16x128xbf16>, vector<128x128xbf16>, vector<16x128xf32> -> vector<16x128xf32>
    %cst_11 = arith.constant dense<0.000000e+00> : vector<16x128xf32>
    %42 = tpu.matmul %40, %3, %cst_11 {dimension_numbers = #tpu.dot_dimension_numbers<[1], [0], [0], [1], [0, 0, 1, 1], [], []>} : vector<16x128xbf16>, vector<128x128xbf16>, vector<16x128xf32> -> vector<16x128xf32>
    %43 = arith.addf %41, %42 : vector<16x128xf32>
    %44 = tpu.reciprocal %43 {approx = true} : vector<16x128xf32> -> vector<16x128xf32>
    %45 = arith.mulf %36, %44 : vector<16x128xf32>
    %cst_12 = arith.constant dense<0.000000e+00> : vector<128xf32>
    %46 = vector.multi_reduction <add>, %45, %cst_12 [0] : vector<16x128xf32> to vector<128xf32>
    %47 = vector.shape_cast %46 : vector<128xf32> to vector<1x128xf32>
    %48 = tpu.reciprocal %47 {approx = true} : vector<1x128xf32> -> vector<1x128xf32>
    %49 = vector.broadcast %48 : vector<1x128xf32> to vector<16x128xf32>
    %50 = arith.mulf %45, %49 : vector<16x128xf32>
    %51 = arith.truncf %50 : vector<16x128xf32> to vector<16x128xbf16>
    %52 = arith.extf %51 : vector<16x128xbf16> to vector<16x128xf32>
    %53 = arith.subf %50, %52 : vector<16x128xf32>
    %54 = arith.truncf %53 : vector<16x128xf32> to vector<16x128xbf16>
    %cst_13 = arith.constant dense<0.000000e+00> : vector<16x128xf32>
    %55 = tpu.matmul %51, %3, %cst_13 {dimension_numbers = #tpu.dot_dimension_numbers<[1], [0], [0], [1], [0, 0, 1, 1], [], []>} : vector<16x128xbf16>, vector<128x128xbf16>, vector<16x128xf32> -> vector<16x128xf32>
    %cst_14 = arith.constant dense<0.000000e+00> : vector<16x128xf32>
    %56 = tpu.matmul %54, %3, %cst_14 {dimension_numbers = #tpu.dot_dimension_numbers<[1], [0], [0], [1], [0, 0, 1, 1], [], []>} : vector<16x128xbf16>, vector<128x128xbf16>, vector<16x128xf32> -> vector<16x128xf32>
    %57 = arith.addf %55, %56 : vector<16x128xf32>
    %58 = tpu.reciprocal %57 {approx = true} : vector<16x128xf32> -> vector<16x128xf32>
    %59 = arith.mulf %50, %58 : vector<16x128xf32>
    %cst_15 = arith.constant dense<0.000000e+00> : vector<128xf32>
    %60 = vector.multi_reduction <add>, %59, %cst_15 [0] : vector<16x128xf32> to vector<128xf32>
    %61 = vector.shape_cast %60 : vector<128xf32> to vector<1x128xf32>
    %62 = tpu.reciprocal %61 {approx = true} : vector<1x128xf32> -> vector<1x128xf32>
    %63 = vector.broadcast %62 : vector<1x128xf32> to vector<16x128xf32>
    %64 = arith.mulf %59, %63 : vector<16x128xf32>
    %65 = arith.truncf %64 : vector<16x128xf32> to vector<16x128xbf16>
    %66 = arith.extf %65 : vector<16x128xbf16> to vector<16x128xf32>
    %67 = arith.subf %64, %66 : vector<16x128xf32>
    %68 = arith.truncf %67 : vector<16x128xf32> to vector<16x128xbf16>
    %cst_16 = arith.constant dense<0.000000e+00> : vector<16x128xf32>
    %69 = tpu.matmul %65, %3, %cst_16 {dimension_numbers = #tpu.dot_dimension_numbers<[1], [0], [0], [1], [0, 0, 1, 1], [], []>} : vector<16x128xbf16>, vector<128x128xbf16>, vector<16x128xf32> -> vector<16x128xf32>
    %cst_17 = arith.constant dense<0.000000e+00> : vector<16x128xf32>
    %70 = tpu.matmul %68, %3, %cst_17 {dimension_numbers = #tpu.dot_dimension_numbers<[1], [0], [0], [1], [0, 0, 1, 1], [], []>} : vector<16x128xbf16>, vector<128x128xbf16>, vector<16x128xf32> -> vector<16x128xf32>
    %71 = arith.addf %69, %70 : vector<16x128xf32>
    %72 = tpu.reciprocal %71 {approx = true} : vector<16x128xf32> -> vector<16x128xf32>
    %73 = arith.mulf %64, %72 : vector<16x128xf32>
    %cst_18 = arith.constant dense<0.000000e+00> : vector<128xf32>
    %74 = vector.multi_reduction <add>, %73, %cst_18 [0] : vector<16x128xf32> to vector<128xf32>
    %75 = vector.shape_cast %74 : vector<128xf32> to vector<1x128xf32>
    %76 = tpu.reciprocal %75 {approx = true} : vector<1x128xf32> -> vector<1x128xf32>
    %77 = vector.broadcast %76 : vector<1x128xf32> to vector<16x128xf32>
    %78 = arith.mulf %73, %77 : vector<16x128xf32>
    %79 = arith.truncf %78 : vector<16x128xf32> to vector<16x128xbf16>
    %80 = arith.extf %79 : vector<16x128xbf16> to vector<16x128xf32>
    %81 = arith.subf %78, %80 : vector<16x128xf32>
    %82 = arith.truncf %81 : vector<16x128xf32> to vector<16x128xbf16>
    %cst_19 = arith.constant dense<0.000000e+00> : vector<16x128xf32>
    %83 = tpu.matmul %79, %3, %cst_19 {dimension_numbers = #tpu.dot_dimension_numbers<[1], [0], [0], [1], [0, 0, 1, 1], [], []>} : vector<16x128xbf16>, vector<128x128xbf16>, vector<16x128xf32> -> vector<16x128xf32>
    %cst_20 = arith.constant dense<0.000000e+00> : vector<16x128xf32>
    %84 = tpu.matmul %82, %3, %cst_20 {dimension_numbers = #tpu.dot_dimension_numbers<[1], [0], [0], [1], [0, 0, 1, 1], [], []>} : vector<16x128xbf16>, vector<128x128xbf16>, vector<16x128xf32> -> vector<16x128xf32>
    %85 = arith.addf %83, %84 : vector<16x128xf32>
    %86 = tpu.reciprocal %85 {approx = true} : vector<16x128xf32> -> vector<16x128xf32>
    %87 = arith.mulf %78, %86 : vector<16x128xf32>
    %cst_21 = arith.constant dense<0.000000e+00> : vector<128xf32>
    %88 = vector.multi_reduction <add>, %87, %cst_21 [0] : vector<16x128xf32> to vector<128xf32>
    %89 = vector.shape_cast %88 : vector<128xf32> to vector<1x128xf32>
    %90 = tpu.reciprocal %89 {approx = true} : vector<1x128xf32> -> vector<1x128xf32>
    %91 = vector.broadcast %90 : vector<1x128xf32> to vector<16x128xf32>
    %92 = arith.mulf %87, %91 : vector<16x128xf32>
    %93 = arith.truncf %92 : vector<16x128xf32> to vector<16x128xbf16>
    %94 = arith.extf %93 : vector<16x128xbf16> to vector<16x128xf32>
    %95 = arith.subf %92, %94 : vector<16x128xf32>
    %96 = arith.truncf %95 : vector<16x128xf32> to vector<16x128xbf16>
    %cst_22 = arith.constant dense<0.000000e+00> : vector<16x128xf32>
    %97 = tpu.matmul %93, %3, %cst_22 {dimension_numbers = #tpu.dot_dimension_numbers<[1], [0], [0], [1], [0, 0, 1, 1], [], []>} : vector<16x128xbf16>, vector<128x128xbf16>, vector<16x128xf32> -> vector<16x128xf32>
    %cst_23 = arith.constant dense<0.000000e+00> : vector<16x128xf32>
    %98 = tpu.matmul %96, %3, %cst_23 {dimension_numbers = #tpu.dot_dimension_numbers<[1], [0], [0], [1], [0, 0, 1, 1], [], []>} : vector<16x128xbf16>, vector<128x128xbf16>, vector<16x128xf32> -> vector<16x128xf32>
    %99 = arith.addf %97, %98 : vector<16x128xf32>
    %100 = tpu.reciprocal %99 {approx = true} : vector<16x128xf32> -> vector<16x128xf32>
    %101 = arith.mulf %92, %100 : vector<16x128xf32>
    %cst_24 = arith.constant dense<0.000000e+00> : vector<128xf32>
    %102 = vector.multi_reduction <add>, %101, %cst_24 [0] : vector<16x128xf32> to vector<128xf32>
    %103 = vector.shape_cast %102 : vector<128xf32> to vector<1x128xf32>
    %104 = tpu.reciprocal %103 {approx = true} : vector<1x128xf32> -> vector<1x128xf32>
    %105 = vector.broadcast %104 : vector<1x128xf32> to vector<16x128xf32>
    %106 = arith.mulf %101, %105 : vector<16x128xf32>
    %107 = arith.truncf %106 : vector<16x128xf32> to vector<16x128xbf16>
    %108 = arith.extf %107 : vector<16x128xbf16> to vector<16x128xf32>
    %109 = arith.subf %106, %108 : vector<16x128xf32>
    %110 = arith.truncf %109 : vector<16x128xf32> to vector<16x128xbf16>
    %cst_25 = arith.constant dense<0.000000e+00> : vector<16x128xf32>
    %111 = tpu.matmul %107, %3, %cst_25 {dimension_numbers = #tpu.dot_dimension_numbers<[1], [0], [0], [1], [0, 0, 1, 1], [], []>} : vector<16x128xbf16>, vector<128x128xbf16>, vector<16x128xf32> -> vector<16x128xf32>
    %cst_26 = arith.constant dense<0.000000e+00> : vector<16x128xf32>
    %112 = tpu.matmul %110, %3, %cst_26 {dimension_numbers = #tpu.dot_dimension_numbers<[1], [0], [0], [1], [0, 0, 1, 1], [], []>} : vector<16x128xbf16>, vector<128x128xbf16>, vector<16x128xf32> -> vector<16x128xf32>
    %113 = arith.addf %111, %112 : vector<16x128xf32>
    %114 = tpu.reciprocal %113 {approx = true} : vector<16x128xf32> -> vector<16x128xf32>
    %115 = arith.mulf %106, %114 : vector<16x128xf32>
    %cst_27 = arith.constant dense<0.000000e+00> : vector<128xf32>
    %116 = vector.multi_reduction <add>, %115, %cst_27 [0] : vector<16x128xf32> to vector<128xf32>
    %117 = vector.shape_cast %116 : vector<128xf32> to vector<1x128xf32>
    %118 = tpu.reciprocal %117 {approx = true} : vector<1x128xf32> -> vector<1x128xf32>
    %119 = vector.broadcast %118 : vector<1x128xf32> to vector<16x128xf32>
    %120 = arith.mulf %115, %119 : vector<16x128xf32>
    %121 = arith.truncf %120 : vector<16x128xf32> to vector<16x128xbf16>
    %122 = arith.extf %121 : vector<16x128xbf16> to vector<16x128xf32>
    %123 = arith.subf %120, %122 : vector<16x128xf32>
    %124 = arith.truncf %123 : vector<16x128xf32> to vector<16x128xbf16>
    %cst_28 = arith.constant dense<0.000000e+00> : vector<16x128xf32>
    %125 = tpu.matmul %121, %3, %cst_28 {dimension_numbers = #tpu.dot_dimension_numbers<[1], [0], [0], [1], [0, 0, 1, 1], [], []>} : vector<16x128xbf16>, vector<128x128xbf16>, vector<16x128xf32> -> vector<16x128xf32>
    %cst_29 = arith.constant dense<0.000000e+00> : vector<16x128xf32>
    %126 = tpu.matmul %124, %3, %cst_29 {dimension_numbers = #tpu.dot_dimension_numbers<[1], [0], [0], [1], [0, 0, 1, 1], [], []>} : vector<16x128xbf16>, vector<128x128xbf16>, vector<16x128xf32> -> vector<16x128xf32>
    %127 = arith.addf %125, %126 : vector<16x128xf32>
    %128 = tpu.reciprocal %127 {approx = true} : vector<16x128xf32> -> vector<16x128xf32>
    %129 = arith.mulf %120, %128 : vector<16x128xf32>
    %cst_30 = arith.constant dense<0.000000e+00> : vector<128xf32>
    %130 = vector.multi_reduction <add>, %129, %cst_30 [0] : vector<16x128xf32> to vector<128xf32>
    %131 = vector.shape_cast %130 : vector<128xf32> to vector<1x128xf32>
    %132 = tpu.reciprocal %131 {approx = true} : vector<1x128xf32> -> vector<1x128xf32>
    %133 = vector.broadcast %132 : vector<1x128xf32> to vector<16x128xf32>
    %134 = arith.mulf %129, %133 : vector<16x128xf32>
    %135 = arith.truncf %134 : vector<16x128xf32> to vector<16x128xbf16>
    %136 = arith.extf %135 : vector<16x128xbf16> to vector<16x128xf32>
    %137 = arith.subf %134, %136 : vector<16x128xf32>
    %138 = arith.truncf %137 : vector<16x128xf32> to vector<16x128xbf16>
    %cst_31 = arith.constant dense<0.000000e+00> : vector<16x128xf32>
    %139 = tpu.matmul %135, %3, %cst_31 {dimension_numbers = #tpu.dot_dimension_numbers<[1], [0], [0], [1], [0, 0, 1, 1], [], []>} : vector<16x128xbf16>, vector<128x128xbf16>, vector<16x128xf32> -> vector<16x128xf32>
    %cst_32 = arith.constant dense<0.000000e+00> : vector<16x128xf32>
    %140 = tpu.matmul %138, %3, %cst_32 {dimension_numbers = #tpu.dot_dimension_numbers<[1], [0], [0], [1], [0, 0, 1, 1], [], []>} : vector<16x128xbf16>, vector<128x128xbf16>, vector<16x128xf32> -> vector<16x128xf32>
    %141 = arith.addf %139, %140 : vector<16x128xf32>
    %142 = arith.divf %134, %141 : vector<16x128xf32>
    %c0_33 = arith.constant 0 : index
    %c0_34 = arith.constant 0 : index
    %143 = vector.load %arg3[%c0_33, %c0_34] : memref<16x128xf32, #tpu.memory_space<vmem>>, vector<16x128xf32>
    tpu.vector_store %arg3[%c0_33, %c0_34], %142 {strides = array<i32>} : memref<16x128xf32, #tpu.memory_space<vmem>>, vector<16x128xf32>,
    return
  }
  func.func @transform_0(%arg0: i32) -> (i32, i32) {
    %c0_i32 = arith.constant 0 : i32
    %c0_i32_0 = arith.constant 0 : i32
    %c0_i32_1 = arith.constant 0 : i32
    return %c0_i32, %c0_i32_0 : i32, i32
  }
  func.func @transform_1(%arg0: i32) -> (i32, i32) {
    %c0_i32 = arith.constant 0 : i32
    %c0_i32_0 = arith.constant 0 : i32
    %c0_i32_1 = arith.constant 0 : i32
    return %c0_i32, %c0_i32_0 : i32, i32
  }
  func.func @transform_2(%arg0: i32) -> (i32, i32) {
    %c0_i32 = arith.constant 0 : i32
    %c0_i32_0 = arith.constant 0 : i32
    %c0_i32_1 = arith.constant 0 : i32
    return %c0_i32, %c0_i32_0 : i32, i32
  }
}

</mosaic_0001>

<llo_original>
// kernel: sinkhorn_forward.1
$region0: #{sinkhorn_forward.1}
  #allocation0 [shape = 'u32[]', space=smem, size = 0x4, offset = 0x4, fixed_abs, tag = 'smem constant byte address 0x4 - core index']
  #allocation1 [shape = 'u32[144,128]{1,0:T(1,128)}', space=vmem, size = 0x12000, scoped, tag = 'internal scratch']
  %s0 = inlined_call_operand.vmem [shape: f32[16,128], index: 0, kind: input, shape index: {}]
  %s1 = inlined_call_operand.vmem [shape: bf16[128,128], index: 1, kind: input, shape index: {}]
  %s2 = inlined_call_operand.vmem [shape: f32[16,128], index: 2, kind: output, shape index: {}]
  %s3 = sld [smem:[#allocation0]]
  $region18: #{sinkhorn_forward.1} parent=0
    _
  %s5 = ssub.s32 1, %s3
  %s6 = scalar_select 0, %s5, %s3
  // Predicated region
  $region2: #{sinkhorn_forward.1} parent=0 // pred_check
    _
  $region3: #{sinkhorn_forward.1} parent=0 // pred_check_branch
    %8 = sbr.rel (0) target = $region5
  $region4: #{sinkhorn_forward.1} parent=0 // pred_region
    _
  $region5: #{sinkhorn_forward.1} parent=0 // pred_fallthru
    _
  // Predicated region
  $region6: #{sinkhorn_forward.1} parent=0 // pred_check
    _
  $region7: #{sinkhorn_forward.1} parent=0 // pred_check_branch
    %10 = sbr.rel (0) target = $region9
  $region8: #{sinkhorn_forward.1} parent=0 // pred_region
    _
  $region9: #{sinkhorn_forward.1} parent=0 // pred_fallthru
    _
  %v12 = vld [vmem:[%s0] sm:$0xff]
  %v13 = vld [vmem:[%s0 + $0x8] sm:$0xff]
  %v14 = vadd.f32 %v12, 1e-10
  %v15 = vadd.f32 %v13, 1e-10
  %v16 = vld [vmem:[%s1] sm:$0xf]
  %v17 = vld [vmem:[%s1 + $0x4] sm:$0xf]
  %v18 = vld [vmem:[%s1 + $0x8] sm:$0xf]
  %v19 = vld [vmem:[%s1 + $0xc] sm:$0xf]
  %v20 = vld [vmem:[%s1 + $0x10] sm:$0xf]
  %v21 = vld [vmem:[%s1 + $0x14] sm:$0xf]
  %v22 = vld [vmem:[%s1 + $0x18] sm:$0xf]
  %v23 = vld [vmem:[%s1 + $0x1c] sm:$0xf]
  %v24 = vld [vmem:[%s1 + $0x20] sm:$0xf]
  %v25 = vld [vmem:[%s1 + $0x24] sm:$0xf]
  %v26 = vld [vmem:[%s1 + $0x28] sm:$0xf]
  %v27 = vld [vmem:[%s1 + $0x2c] sm:$0xf]
  %v28 = vld [vmem:[%s1 + $0x30] sm:$0xf]
  %v29 = vld [vmem:[%s1 + $0x34] sm:$0xf]
  %v30 = vld [vmem:[%s1 + $0x38] sm:$0xf]
  %v31 = vld [vmem:[%s1 + $0x3c] sm:$0xf]
  %v32 = vadd.f32 %v14, %v15
  %v33 = vrot.slane %v32, 4
  %v34 = vadd.f32 %v32, %v33
  %v35 = vrot.slane %v34, 2
  %v36 = vadd.f32 %v34, %v35
  %v37 = vrot.slane %v36, 1
  %v38 = vadd.f32 %v36, %v37
  %v39 = vrcp.pop %v38
  %v40 = vmul.f32 %v14, %v39
  %v41 = vmul.f32 %v15, %v39
  %v42 = vpack.c.bf16 %v41, %v40
  %v43 = vunpack.c.l.bf16 %v42
  %v44 = vunpack.c.h.bf16 %v42
  %v45 = vsub.f32 %v40, %v43
  %v46 = vsub.f32 %v41, %v44
  %v47 = vpack.c.bf16 %v46, %v45
  %v64 = vunpack.c.l.b16 %v16
  %v65 = vunpack.c.l.b16 %v17
  %v66 = vunpack.c.l.b16 %v18
  %v67 = vunpack.c.l.b16 %v19
  %v68 = vunpack.c.l.b16 %v20
  %v69 = vunpack.c.l.b16 %v21
  %v70 = vunpack.c.l.b16 %v22
  %v71 = vunpack.c.l.b16 %v23
  %v72 = vunpack.c.l.b16 %v24
  %v73 = vunpack.c.l.b16 %v25
  %v74 = vunpack.c.l.b16 %v26
  %v75 = vunpack.c.l.b16 %v27
  %v76 = vunpack.c.l.b16 %v28
  %v77 = vunpack.c.l.b16 %v29
  %v78 = vunpack.c.l.b16 %v30
  %v79 = vunpack.c.l.b16 %v31
  %v80 = vpack.c.b16 %v65, %v64
  %v81 = vpack.c.b16 %v67, %v66
  %v82 = vpack.c.b16 %v69, %v68
  %v83 = vpack.c.b16 %v71, %v70
  %v84 = vpack.c.b16 %v73, %v72
  %v85 = vpack.c.b16 %v75, %v74
  %v86 = vpack.c.b16 %v77, %v76
  %v87 = vpack.c.b16 %v79, %v78
  %96 = vmatprep.subr.bf16.mxu0 0
  %97 = vmatpush1.bf16.msra.mxu0 %v80
  %98 = vmatprep.subr.bf16.mxu0 0
  %99 = vmatpush1.bf16.msra.mxu0 %v81
  %100 = vmatprep.subr.bf16.mxu0 0
  %101 = vmatpush1.bf16.msra.mxu0 %v82
  %102 = vmatprep.subr.bf16.mxu0 0
  %103 = vmatpush1.bf16.msra.mxu0 %v83
  %104 = vmatprep.subr.bf16.mxu0 0
  %105 = vmatpush1.bf16.msra.mxu0 %v84
  %106 = vmatprep.subr.bf16.mxu0 0
  %107 = vmatpush1.bf16.msra.mxu0 %v85
  %108 = vmatprep.subr.bf16.mxu0 0
  %109 = vmatpush1.bf16.msra.mxu0 %v86
  %110 = vmatprep.subr.bf16.mxu0 0
  %111 = vmatpush1.bf16.msra.mxu0 %v87
  %112 = vmatprep.subr.bf16.mxu0 0
  %113 = vmatpush1.bf16.msra.mxu0 0
  %114 = vmatprep.subr.bf16.mxu0 0
  %115 = vmatpush1.bf16.msra.mxu0 0
  %116 = vmatprep.subr.bf16.mxu0 0
  %117 = vmatpush1.bf16.msra.mxu0 0
  %118 = vmatprep.subr.bf16.mxu0 0
  %119 = vmatpush1.bf16.msra.mxu0 0
  %120 = vmatprep.subr.bf16.mxu0 0
  %121 = vmatpush1.bf16.msra.mxu0 0
  %122 = vmatprep.subr.bf16.mxu0 0
  %123 = vmatpush1.bf16.msra.mxu0 0
  %124 = vmatprep.subr.bf16.mxu0 0
  %125 = vmatpush1.bf16.msra.mxu0 0
  %126 = vmatprep.subr.bf16.mxu0 0
  %127 = vmatpush1.bf16.msra.mxu0 0
  %128 = vmatprep.mubr.bf16.mxu0 0
  %129 = vmatmul.mubr.bf16.gmra.mrb[0].mxu0 %v47
  %v130 = vpop.f32.mrb[0].mxu0
  %v131 = vadd.f32 0.0, %v130
  %v132 = vpop.f32.mrb[0].mxu0
  %v133 = vpop.f32.mrb[0].mxu0
  %v134 = vadd.f32 0.0, %v133
  %v135 = vpop.f32.mrb[0].mxu0
  %136 = vdwg.mxu0
  %137 = vmatprep.subr.bf16.mxu0 0
  %138 = vmatpush1.bf16.msra.mxu0 %v80
  %139 = vmatprep.subr.bf16.mxu0 0
  %140 = vmatpush1.bf16.msra.mxu0 %v81
  %141 = vmatprep.subr.bf16.mxu0 0
  %142 = vmatpush1.bf16.msra.mxu0 %v82
  %143 = vmatprep.subr.bf16.mxu0 0
  %144 = vmatpush1.bf16.msra.mxu0 %v83
  %145 = vmatprep.subr.bf16.mxu0 0
  %146 = vmatpush1.bf16.msra.mxu0 %v84
  %147 = vmatprep.subr.bf16.mxu0 0
  %148 = vmatpush1.bf16.msra.mxu0 %v85
  %149 = vmatprep.subr.bf16.mxu0 0
  %150 = vmatpush1.bf16.msra.mxu0 %v86
  %151 = vmatprep.subr.bf16.mxu0 0
  %152 = vmatpush1.bf16.msra.mxu0 %v87
  %153 = vmatprep.subr.bf16.mxu0 0
  %154 = vmatpush1.bf16.msra.mxu0 0
  %155 = vmatprep.subr.bf16.mxu0 0
  %156 = vmatpush1.bf16.msra.mxu0 0
  %157 = vmatprep.subr.bf16.mxu0 0
  %158 = vmatpush1.bf16.msra.mxu0 0
  %159 = vmatprep.subr.bf16.mxu0 0
  %160 = vmatpush1.bf16.msra.mxu0 0
  %161 = vmatprep.subr.bf16.mxu0 0
  %162 = vmatpush1.bf16.msra.mxu0 0
  %163 = vmatprep.subr.bf16.mxu0 0
  %164 = vmatpush1.bf16.msra.mxu0 0
  %165 = vmatprep.subr.bf16.mxu0 0
  %166 = vmatpush1.bf16.msra.mxu0 0
  %167 = vmatprep.subr.bf16.mxu0 0
  %168 = vmatpush1.bf16.msra.mxu0 0
  %169 = vmatprep.mubr.bf16.mxu0 0
  %170 = vmatmul.mubr.bf16.gmra.mrb[0].mxu0 %v42
  %v171 = vpop.f32.mrb[0].mxu0
  %v172 = vadd.f32 %v131, %v171
  %v173 = vpop.f32.mrb[0].mxu0
  %v174 = vpop.f32.mrb[0].mxu0
  %v175 = vadd.f32 %v134, %v174
  %v176 = vpop.f32.mrb[0].mxu0
  %177 = vdwg.mxu0
  %v178 = vrcp.pop %v172
  %v179 = vrcp.pop %v175
  %v180 = vmul.f32 %v40, %v178
  %v181 = vmul.f32 %v41, %v179
  %v182 = vadd.f32 %v180, %v181
  %v183 = vrot.slane %v182, 4
  %v184 = vadd.f32 %v182, %v183
  %v185 = vrot.slane %v184, 2
  %v186 = vadd.f32 %v184, %v185
  %v187 = vrot.slane %v186, 1
  %v188 = vadd.f32 %v186, %v187
  %v189 = vrcp.pop %v188
  %v190 = vmul.f32 %v180, %v189
  %v191 = vmul.f32 %v181, %v189
  %v192 = vpack.c.bf16 %v191, %v190
  %v193 = vunpack.c.l.bf16 %v192
  %v194 = vunpack.c.h.bf16 %v192
  %v195 = vsub.f32 %v190, %v193
  %v196 = vsub.f32 %v191, %v194
  %v197 = vpack.c.bf16 %v196, %v195
  %198 = vmatprep.subr.bf16.mxu0 0
  %199 = vmatpush1.bf16.msra.mxu0 %v80
  %200 = vmatprep.subr.bf16.mxu0 0
  %201 = vmatpush1.bf16.msra.mxu0 %v81
  %202 = vmatprep.subr.bf16.mxu0 0
  %203 = vmatpush1.bf16.msra.mxu0 %v82
  %204 = vmatprep.subr.bf16.mxu0 0
  %205 = vmatpush1.bf16.msra.mxu0 %v83
  %206 = vmatprep.subr.bf16.mxu0 0
  %207 = vmatpush1.bf16.msra.mxu0 %v84
  %208 = vmatprep.subr.bf16.mxu0 0
  %209 = vmatpush1.bf16.msra.mxu0 %v85
  %210 = vmatprep.subr.bf16.mxu0 0
  %211 = vmatpush1.bf16.msra.mxu0 %v86
  %212 = vmatprep.subr.bf16.mxu0 0
  %213 = vmatpush1.bf16.msra.mxu0 %v87
  %214 = vmatprep.subr.bf16.mxu0 0
  %215 = vmatpush1.bf16.msra.mxu0 0
  %216 = vmatprep.subr.bf16.mxu0 0
  %217 = vmatpush1.bf16.msra.mxu0 0
  %218 = vmatprep.subr.bf16.mxu0 0
  %219 = vmatpush1.bf16.msra.mxu0 0
  %220 = vmatprep.subr.bf16.mxu0 0
  %221 = vmatpush1.bf16.msra.mxu0 0
  %222 = vmatprep.subr.bf16.mxu0 0
  %223 = vmatpush1.bf16.msra.mxu0 0
  %224 = vmatprep.subr.bf16.mxu0 0
  %225 = vmatpush1.bf16.msra.mxu0 0
  %226 = vmatprep.subr.bf16.mxu0 0
  %227 = vmatpush1.bf16.msra.mxu0 0
  %228 = vmatprep.subr.bf16.mxu0 0
  %229 = vmatpush1.bf16.msra.mxu0 0
  %230 = vmatprep.mubr.bf16.mxu0 0
  %231 = vmatmul.mubr.bf16.gmra.mrb[0].mxu0 %v197
  %v232 = vpop.f32.mrb[0].mxu0
  %v233 = vadd.f32 0.0, %v232
  %v234 = vpop.f32.mrb[0].mxu0
  %v235 = vpop.f32.mrb[0].mxu0
  %v236 = vadd.f32 0.0, %v235
  %v237 = vpop.f32.mrb[0].mxu0
  %238 = vdwg.mxu0
  %239 = vmatprep.subr.bf16.mxu0 0
  %240 = vmatpush1.bf16.msra.mxu0 %v80
  %241 = vmatprep.subr.bf16.mxu0 0
  %242 = vmatpush1.bf16.msra.mxu0 %v81
  %243 = vmatprep.subr.bf16.mxu0 0
  %244 = vmatpush1.bf16.msra.mxu0 %v82
  %245 = vmatprep.subr.bf16.mxu0 0
  %246 = vmatpush1.bf16.msra.mxu0 %v83
  %247 = vmatprep.subr.bf16.mxu0 0
  %248 = vmatpush1.bf16.msra.mxu0 %v84
  %249 = vmatprep.subr.bf16.mxu0 0
  %250 = vmatpush1.bf16.msra.mxu0 %v85
  %251 = vmatprep.subr.bf16.mxu0 0
  %252 = vmatpush1.bf16.msra.mxu0 %v86
  %253 = vmatprep.subr.bf16.mxu0 0
  %254 = vmatpush1.bf16.msra.mxu0 %v87
  %255 = vmatprep.subr.bf16.mxu0 0
  %256 = vmatpush1.bf16.msra.mxu0 0
  %257 = vmatprep.subr.bf16.mxu0 0
  %258 = vmatpush1.bf16.msra.mxu0 0
  %259 = vmatprep.subr.bf16.mxu0 0
  %260 = vmatpush1.bf16.msra.mxu0 0
  %261 = vmatprep.subr.bf16.mxu0 0
  %262 = vmatpush1.bf16.msra.mxu0 0
  %263 = vmatprep.subr.bf16.mxu0 0
  %264 = vmatpush1.bf16.msra.mxu0 0
  %265 = vmatprep.subr.bf16.mxu0 0
  %266 = vmatpush1.bf16.msra.mxu0 0
  %267 = vmatprep.subr.bf16.mxu0 0
  %268 = vmatpush1.bf16.msra.mxu0 0
  %269 = vmatprep.subr.bf16.mxu0 0
  %270 = vmatpush1.bf16.msra.mxu0 0
  %271 = vmatprep.mubr.bf16.mxu0 0
  %272 = vmatmul.mubr.bf16.gmra.mrb[0].mxu0 %v192
  %v273 = vpop.f32.mrb[0].mxu0
  %v274 = vadd.f32 %v233, %v273
  %v275 = vpop.f32.mrb[0].mxu0
  %v276 = vpop.f32.mrb[0].mxu0
  %v277 = vadd.f32 %v236, %v276
  %v278 = vpop.f32.mrb[0].mxu0
  %279 = vdwg.mxu0
  %v280 = vrcp.pop %v274
  %v281 = vrcp.pop %v277
  %v282 = vmul.f32 %v190, %v280
  %v283 = vmul.f32 %v191, %v281
  %v284 = vadd.f32 %v282, %v283
  %v285 = vrot.slane %v284, 4
  %v286 = vadd.f32 %v284, %v285
  %v287 = vrot.slane %v286, 2
  %v288 = vadd.f32 %v286, %v287
  %v289 = vrot.slane %v288, 1
  %v290 = vadd.f32 %v288, %v289
  %v291 = vrcp.pop %v290
  %v292 = vmul.f32 %v282, %v291
  %v293 = vmul.f32 %v283, %v291
  %v294 = vpack.c.bf16 %v293, %v292
  %v295 = vunpack.c.l.bf16 %v294
  %v296 = vunpack.c.h.bf16 %v294
  %v297 = vsub.f32 %v292, %v295
  %v298 = vsub.f32 %v293, %v296
  %v299 = vpack.c.bf16 %v298, %v297
  %300 = vmatprep.subr.bf16.mxu0 0
  %301 = vmatpush1.bf16.msra.mxu0 %v80
  %302 = vmatprep.subr.bf16.mxu0 0
  %303 = vmatpush1.bf16.msra.mxu0 %v81
  %304 = vmatprep.subr.bf16.mxu0 0
  %305 = vmatpush1.bf16.msra.mxu0 %v82
  %306 = vmatprep.subr.bf16.mxu0 0
  %307 = vmatpush1.bf16.msra.mxu0 %v83
  %308 = vmatprep.subr.bf16.mxu0 0
  %309 = vmatpush1.bf16.msra.mxu0 %v84
  %310 = vmatprep.subr.bf16.mxu0 0
  %311 = vmatpush1.bf16.msra.mxu0 %v85
  %312 = vmatprep.subr.bf16.mxu0 0
  %313 = vmatpush1.bf16.msra.mxu0 %v86
  %314 = vmatprep.subr.bf16.mxu0 0
  %315 = vmatpush1.bf16.msra.mxu0 %v87
  %316 = vmatprep.subr.bf16.mxu0 0
  %317 = vmatpush1.bf16.msra.mxu0 0
  %318 = vmatprep.subr.bf16.mxu0 0
  %319 = vmatpush1.bf16.msra.mxu0 0
  %320 = vmatprep.subr.bf16.mxu0 0
  %321 = vmatpush1.bf16.msra.mxu0 0
  %322 = vmatprep.subr.bf16.mxu0 0
  %323 = vmatpush1.bf16.msra.mxu0 0
  %324 = vmatprep.subr.bf16.mxu0 0
  %325 = vmatpush1.bf16.msra.mxu0 0
  %326 = vmatprep.subr.bf16.mxu0 0
  %327 = vmatpush1.bf16.msra.mxu0 0
  %328 = vmatprep.subr.bf16.mxu0 0
  %329 = vmatpush1.bf16.msra.mxu0 0
  %330 = vmatprep.subr.bf16.mxu0 0
  %331 = vmatpush1.bf16.msra.mxu0 0
  %332 = vmatprep.mubr.bf16.mxu0 0
  %333 = vmatmul.mubr.bf16.gmra.mrb[0].mxu0 %v299
  %v334 = vpop.f32.mrb[0].mxu0
  %v335 = vadd.f32 0.0, %v334
  %v336 = vpop.f32.mrb[0].mxu0
  %v337 = vpop.f32.mrb[0].mxu0
  %v338 = vadd.f32 0.0, %v337
  %v339 = vpop.f32.mrb[0].mxu0
  %340 = vdwg.mxu0
  %341 = vmatprep.subr.bf16.mxu0 0
  %342 = vmatpush1.bf16.msra.mxu0 %v80
  %343 = vmatprep.subr.bf16.mxu0 0
  %344 = vmatpush1.bf16.msra.mxu0 %v81
  %345 = vmatprep.subr.bf16.mxu0 0
  %346 = vmatpush1.bf16.msra.mxu0 %v82
  %347 = vmatprep.subr.bf16.mxu0 0
  %348 = vmatpush1.bf16.msra.mxu0 %v83
  %349 = vmatprep.subr.bf16.mxu0 0
  %350 = vmatpush1.bf16.msra.mxu0 %v84
  %351 = vmatprep.subr.bf16.mxu0 0
  %352 = vmatpush1.bf16.msra.mxu0 %v85
  %353 = vmatprep.subr.bf16.mxu0 0
  %354 = vmatpush1.bf16.msra.mxu0 %v86
  %355 = vmatprep.subr.bf16.mxu0 0
  %356 = vmatpush1.bf16.msra.mxu0 %v87
  %357 = vmatprep.subr.bf16.mxu0 0
  %358 = vmatpush1.bf16.msra.mxu0 0
  %359 = vmatprep.subr.bf16.mxu0 0
  %360 = vmatpush1.bf16.msra.mxu0 0
  %361 = vmatprep.subr.bf16.mxu0 0
  %362 = vmatpush1.bf16.msra.mxu0 0
  %363 = vmatprep.subr.bf16.mxu0 0
  %364 = vmatpush1.bf16.msra.mxu0 0
  %365 = vmatprep.subr.bf16.mxu0 0
  %366 = vmatpush1.bf16.msra.mxu0 0
  %367 = vmatprep.subr.bf16.mxu0 0
  %368 = vmatpush1.bf16.msra.mxu0 0
  %369 = vmatprep.subr.bf16.mxu0 0
  %370 = vmatpush1.bf16.msra.mxu0 0
  %371 = vmatprep.subr.bf16.mxu0 0
  %372 = vmatpush1.bf16.msra.mxu0 0
  %373 = vmatprep.mubr.bf16.mxu0 0
  %374 = vmatmul.mubr.bf16.gmra.mrb[0].mxu0 %v294
  %v375 = vpop.f32.mrb[0].mxu0
  %v376 = vadd.f32 %v335, %v375
  %v377 = vpop.f32.mrb[0].mxu0
  %v378 = vpop.f32.mrb[0].mxu0
  %v379 = vadd.f32 %v338, %v378
  %v380 = vpop.f32.mrb[0].mxu0
  %381 = vdwg.mxu0
  %v382 = vrcp.pop %v376
  %v383 = vrcp.pop %v379
  %v384 = vmul.f32 %v292, %v382
  %v385 = vmul.f32 %v293, %v383
  %v386 = vadd.f32 %v384, %v385
  %v387 = vrot.slane %v386, 4
  %v388 = vadd.f32 %v386, %v387
  %v389 = vrot.slane %v388, 2
  %v390 = vadd.f32 %v388, %v389
  %v391 = vrot.slane %v390, 1
  %v392 = vadd.f32 %v390, %v391
  %v393 = vrcp.pop %v392
  %v394 = vmul.f32 %v384, %v393
  %v395 = vmul.f32 %v385, %v393
  %v396 = vpack.c.bf16 %v395, %v394
  %v397 = vunpack.c.l.bf16 %v396
  %v398 = vunpack.c.h.bf16 %v396
  %v399 = vsub.f32 %v394, %v397
  %v400 = vsub.f32 %v395, %v398
  %v401 = vpack.c.bf16 %v400, %v399
  %402 = vmatprep.subr.bf16.mxu0 0
  %403 = vmatpush1.bf16.msra.mxu0 %v80
  %404 = vmatprep.subr.bf16.mxu0 0
  %405 = vmatpush1.bf16.msra.mxu0 %v81
  %406 = vmatprep.subr.bf16.mxu0 0
  %407 = vmatpush1.bf16.msra.mxu0 %v82
  %408 = vmatprep.subr.bf16.mxu0 0
  %409 = vmatpush1.bf16.msra.mxu0 %v83
  %410 = vmatprep.subr.bf16.mxu0 0
  %411 = vmatpush1.bf16.msra.mxu0 %v84
  %412 = vmatprep.subr.bf16.mxu0 0
  %413 = vmatpush1.bf16.msra.mxu0 %v85
  %414 = vmatprep.subr.bf16.mxu0 0
  %415 = vmatpush1.bf16.msra.mxu0 %v86
  %416 = vmatprep.subr.bf16.mxu0 0
  %417 = vmatpush1.bf16.msra.mxu0 %v87
  %418 = vmatprep.subr.bf16.mxu0 0
  %419 = vmatpush1.bf16.msra.mxu0 0
  %420 = vmatprep.subr.bf16.mxu0 0
  %421 = vmatpush1.bf16.msra.mxu0 0
  %422 = vmatprep.subr.bf16.mxu0 0
  %423 = vmatpush1.bf16.msra.mxu0 0
  %424 = vmatprep.subr.bf16.mxu0 0
  %425 = vmatpush1.bf16.msra.mxu0 0
  %426 = vmatprep.subr.bf16.mxu0 0
  %427 = vmatpush1.bf16.msra.mxu0 0
  %428 = vmatprep.subr.bf16.mxu0 0
  %429 = vmatpush1.bf16.msra.mxu0 0
  %430 = vmatprep.subr.bf16.mxu0 0
  %431 = vmatpush1.bf16.msra.mxu0 0
  %432 = vmatprep.subr.bf16.mxu0 0
  %433 = vmatpush1.bf16.msra.mxu0 0
  %434 = vmatprep.mubr.bf16.mxu0 0
  %435 = vmatmul.mubr.bf16.gmra.mrb[0].mxu0 %v401
  %v436 = vpop.f32.mrb[0].mxu0
  %v437 = vadd.f32 0.0, %v436
  %v438 = vpop.f32.mrb[0].mxu0
  %v439 = vpop.f32.mrb[0].mxu0
  %v440 = vadd.f32 0.0, %v439
  %v441 = vpop.f32.mrb[0].mxu0
  %442 = vdwg.mxu0
  %443 = vmatprep.subr.bf16.mxu0 0
  %444 = vmatpush1.bf16.msra.mxu0 %v80
  %445 = vmatprep.subr.bf16.mxu0 0
  %446 = vmatpush1.bf16.msra.mxu0 %v81
  %447 = vmatprep.subr.bf16.mxu0 0
  %448 = vmatpush1.bf16.msra.mxu0 %v82
  %449 = vmatprep.subr.bf16.mxu0 0
  %450 = vmatpush1.bf16.msra.mxu0 %v83
  %451 = vmatprep.subr.bf16.mxu0 0
  %452 = vmatpush1.bf16.msra.mxu0 %v84
  %453 = vmatprep.subr.bf16.mxu0 0
  %454 = vmatpush1.bf16.msra.mxu0 %v85
  %455 = vmatprep.subr.bf16.mxu0 0
  %456 = vmatpush1.bf16.msra.mxu0 %v86
  %457 = vmatprep.subr.bf16.mxu0 0
  %458 = vmatpush1.bf16.msra.mxu0 %v87
  %459 = vmatprep.subr.bf16.mxu0 0
  %460 = vmatpush1.bf16.msra.mxu0 0
  %461 = vmatprep.subr.bf16.mxu0 0
  %462 = vmatpush1.bf16.msra.mxu0 0
  %463 = vmatprep.subr.bf16.mxu0 0
  %464 = vmatpush1.bf16.msra.mxu0 0
  %465 = vmatprep.subr.bf16.mxu0 0
  %466 = vmatpush1.bf16.msra.mxu0 0
  %467 = vmatprep.subr.bf16.mxu0 0
  %468 = vmatpush1.bf16.msra.mxu0 0
  %469 = vmatprep.subr.bf16.mxu0 0
  %470 = vmatpush1.bf16.msra.mxu0 0
  %471 = vmatprep.subr.bf16.mxu0 0
  %472 = vmatpush1.bf16.msra.mxu0 0
  %473 = vmatprep.subr.bf16.mxu0 0
  %474 = vmatpush1.bf16.msra.mxu0 0
  %475 = vmatprep.mubr.bf16.mxu0 0
  %476 = vmatmul.mubr.bf16.gmra.mrb[0].mxu0 %v396
  %v477 = vpop.f32.mrb[0].mxu0
  %v478 = vadd.f32 %v437, %v477
  %v479 = vpop.f32.mrb[0].mxu0
  %v480 = vpop.f32.mrb[0].mxu0
  %v481 = vadd.f32 %v440, %v480
  %v482 = vpop.f32.mrb[0].mxu0
  %483 = vdwg.mxu0
  %v484 = vrcp.pop %v478
  %v485 = vrcp.pop %v481
  %v486 = vmul.f32 %v394, %v484
  %v487 = vmul.f32 %v395, %v485
  %v488 = vadd.f32 %v486, %v487
  %v489 = vrot.slane %v488, 4
  %v490 = vadd.f32 %v488, %v489
  %v491 = vrot.slane %v490, 2
  %v492 = vadd.f32 %v490, %v491
  %v493 = vrot.slane %v492, 1
  %v494 = vadd.f32 %v492, %v493
  %v495 = vrcp.pop %v494
  %v496 = vmul.f32 %v486, %v495
  %v497 = vmul.f32 %v487, %v495
  %v498 = vpack.c.bf16 %v497, %v496
  %v499 = vunpack.c.l.bf16 %v498
  %v500 = vunpack.c.h.bf16 %v498
  %v501 = vsub.f32 %v496, %v499
  %v502 = vsub.f32 %v497, %v500
  %v503 = vpack.c.bf16 %v502, %v501
  %504 = vmatprep.subr.bf16.mxu0 0
  %505 = vmatpush1.bf16.msra.mxu0 %v80
  %506 = vmatprep.subr.bf16.mxu0 0
  %507 = vmatpush1.bf16.msra.mxu0 %v81
  %508 = vmatprep.subr.bf16.mxu0 0
  %509 = vmatpush1.bf16.msra.mxu0 %v82
  %510 = vmatprep.subr.bf16.mxu0 0
  %511 = vmatpush1.bf16.msra.mxu0 %v83
  %512 = vmatprep.subr.bf16.mxu0 0
  %513 = vmatpush1.bf16.msra.mxu0 %v84
  %514 = vmatprep.subr.bf16.mxu0 0
  %515 = vmatpush1.bf16.msra.mxu0 %v85
  %516 = vmatprep.subr.bf16.mxu0 0
  %517 = vmatpush1.bf16.msra.mxu0 %v86
  %518 = vmatprep.subr.bf16.mxu0 0
  %519 = vmatpush1.bf16.msra.mxu0 %v87
  %520 = vmatprep.subr.bf16.mxu0 0
  %521 = vmatpush1.bf16.msra.mxu0 0
  %522 = vmatprep.subr.bf16.mxu0 0
  %523 = vmatpush1.bf16.msra.mxu0 0
  %524 = vmatprep.subr.bf16.mxu0 0
  %525 = vmatpush1.bf16.msra.mxu0 0
  %526 = vmatprep.subr.bf16.mxu0 0
  %527 = vmatpush1.bf16.msra.mxu0 0
  %528 = vmatprep.subr.bf16.mxu0 0
  %529 = vmatpush1.bf16.msra.mxu0 0
  %530 = vmatprep.subr.bf16.mxu0 0
  %531 = vmatpush1.bf16.msra.mxu0 0
  %532 = vmatprep.subr.bf16.mxu0 0
  %533 = vmatpush1.bf16.msra.mxu0 0
  %534 = vmatprep.subr.bf16.mxu0 0
  %535 = vmatpush1.bf16.msra.mxu0 0
  %536 = vmatprep.mubr.bf16.mxu0 0
  %537 = vmatmul.mubr.bf16.gmra.mrb[0].mxu0 %v503
  %v538 = vpop.f32.mrb[0].mxu0
  %v539 = vadd.f32 0.0, %v538
  %v540 = vpop.f32.mrb[0].mxu0
  %v541 = vpop.f32.mrb[0].mxu0
  %v542 = vadd.f32 0.0, %v541
  %v543 = vpop.f32.mrb[0].mxu0
  %544 = vdwg.mxu0
  %545 = vmatprep.subr.bf16.mxu0 0
  %546 = vmatpush1.bf16.msra.mxu0 %v80
  %547 = vmatprep.subr.bf16.mxu0 0
  %548 = vmatpush1.bf16.msra.mxu0 %v81
  %549 = vmatprep.subr.bf16.mxu0 0
  %550 = vmatpush1.bf16.msra.mxu0 %v82
  %551 = vmatprep.subr.bf16.mxu0 0
  %552 = vmatpush1.bf16.msra.mxu0 %v83
  %553 = vmatprep.subr.bf16.mxu0 0
  %554 = vmatpush1.bf16.msra.mxu0 %v84
  %555 = vmatprep.subr.bf16.mxu0 0
  %556 = vmatpush1.bf16.msra.mxu0 %v85
  %557 = vmatprep.subr.bf16.mxu0 0
  %558 = vmatpush1.bf16.msra.mxu0 %v86
  %559 = vmatprep.subr.bf16.mxu0 0
  %560 = vmatpush1.bf16.msra.mxu0 %v87
  %561 = vmatprep.subr.bf16.mxu0 0
  %562 = vmatpush1.bf16.msra.mxu0 0
  %563 = vmatprep.subr.bf16.mxu0 0
  %564 = vmatpush1.bf16.msra.mxu0 0
  %565 = vmatprep.subr.bf16.mxu0 0
  %566 = vmatpush1.bf16.msra.mxu0 0
  %567 = vmatprep.subr.bf16.mxu0 0
  %568 = vmatpush1.bf16.msra.mxu0 0
  %569 = vmatprep.subr.bf16.mxu0 0
  %570 = vmatpush1.bf16.msra.mxu0 0
  %571 = vmatprep.subr.bf16.mxu0 0
  %572 = vmatpush1.bf16.msra.mxu0 0
  %573 = vmatprep.subr.bf16.mxu0 0
  %574 = vmatpush1.bf16.msra.mxu0 0
  %575 = vmatprep.subr.bf16.mxu0 0
  %576 = vmatpush1.bf16.msra.mxu0 0
  %577 = vmatprep.mubr.bf16.mxu0 0
  %578 = vmatmul.mubr.bf16.gmra.mrb[0].mxu0 %v498
  %v579 = vpop.f32.mrb[0].mxu0
  %v580 = vadd.f32 %v539, %v579
  %v581 = vpop.f32.mrb[0].mxu0
  %v582 = vpop.f32.mrb[0].mxu0
  %v583 = vadd.f32 %v542, %v582
  %v584 = vpop.f32.mrb[0].mxu0
  %585 = vdwg.mxu0
  %v586 = vrcp.pop %v580
  %v587 = vrcp.pop %v583
  %v588 = vmul.f32 %v496, %v586
  %v589 = vmul.f32 %v497, %v587
  %v590 = vadd.f32 %v588, %v589
  %v591 = vrot.slane %v590, 4
  %v592 = vadd.f32 %v590, %v591
  %v593 = vrot.slane %v592, 2
  %v594 = vadd.f32 %v592, %v593
  %v595 = vrot.slane %v594, 1
  %v596 = vadd.f32 %v594, %v595
  %v597 = vrcp.pop %v596
  %v598 = vmul.f32 %v588, %v597
  %v599 = vmul.f32 %v589, %v597
  %v600 = vpack.c.bf16 %v599, %v598
  %v601 = vunpack.c.l.bf16 %v600
  %v602 = vunpack.c.h.bf16 %v600
  %v603 = vsub.f32 %v598, %v601
  %v604 = vsub.f32 %v599, %v602
  %v605 = vpack.c.bf16 %v604, %v603
  %606 = vmatprep.subr.bf16.mxu0 0
  %607 = vmatpush1.bf16.msra.mxu0 %v80
  %608 = vmatprep.subr.bf16.mxu0 0
  %609 = vmatpush1.bf16.msra.mxu0 %v81
  %610 = vmatprep.subr.bf16.mxu0 0
  %611 = vmatpush1.bf16.msra.mxu0 %v82
  %612 = vmatprep.subr.bf16.mxu0 0
  %613 = vmatpush1.bf16.msra.mxu0 %v83
  %614 = vmatprep.subr.bf16.mxu0 0
  %615 = vmatpush1.bf16.msra.mxu0 %v84
  %616 = vmatprep.subr.bf16.mxu0 0
  %617 = vmatpush1.bf16.msra.mxu0 %v85
  %618 = vmatprep.subr.bf16.mxu0 0
  %619 = vmatpush1.bf16.msra.mxu0 %v86
  %620 = vmatprep.subr.bf16.mxu0 0
  %621 = vmatpush1.bf16.msra.mxu0 %v87
  %622 = vmatprep.subr.bf16.mxu0 0
  %623 = vmatpush1.bf16.msra.mxu0 0
  %624 = vmatprep.subr.bf16.mxu0 0
  %625 = vmatpush1.bf16.msra.mxu0 0
  %626 = vmatprep.subr.bf16.mxu0 0
  %627 = vmatpush1.bf16.msra.mxu0 0
  %628 = vmatprep.subr.bf16.mxu0 0
  %629 = vmatpush1.bf16.msra.mxu0 0
  %630 = vmatprep.subr.bf16.mxu0 0
  %631 = vmatpush1.bf16.msra.mxu0 0
  %632 = vmatprep.subr.bf16.mxu0 0
  %633 = vmatpush1.bf16.msra.mxu0 0
  %634 = vmatprep.subr.bf16.mxu0 0
  %635 = vmatpush1.bf16.msra.mxu0 0
  %636 = vmatprep.subr.bf16.mxu0 0
  %637 = vmatpush1.bf16.msra.mxu0 0
  %638 = vmatprep.mubr.bf16.mxu0 0
  %639 = vmatmul.mubr.bf16.gmra.mrb[0].mxu0 %v605
  %v640 = vpop.f32.mrb[0].mxu0
  %v641 = vadd.f32 0.0, %v640
  %v642 = vpop.f32.mrb[0].mxu0
  %v643 = vpop.f32.mrb[0].mxu0
  %v644 = vadd.f32 0.0, %v643
  %v645 = vpop.f32.mrb[0].mxu0
  %646 = vdwg.mxu0
  %647 = vmatprep.subr.bf16.mxu0 0
  %648 = vmatpush1.bf16.msra.mxu0 %v80
  %649 = vmatprep.subr.bf16.mxu0 0
  %650 = vmatpush1.bf16.msra.mxu0 %v81
  %651 = vmatprep.subr.bf16.mxu0 0
  %652 = vmatpush1.bf16.msra.mxu0 %v82
  %653 = vmatprep.subr.bf16.mxu0 0
  %654 = vmatpush1.bf16.msra.mxu0 %v83
  %655 = vmatprep.subr.bf16.mxu0 0
  %656 = vmatpush1.bf16.msra.mxu0 %v84
  %657 = vmatprep.subr.bf16.mxu0 0
  %658 = vmatpush1.bf16.msra.mxu0 %v85
  %659 = vmatprep.subr.bf16.mxu0 0
  %660 = vmatpush1.bf16.msra.mxu0 %v86
  %661 = vmatprep.subr.bf16.mxu0 0
  %662 = vmatpush1.bf16.msra.mxu0 %v87
  %663 = vmatprep.subr.bf16.mxu0 0
  %664 = vmatpush1.bf16.msra.mxu0 0
  %665 = vmatprep.subr.bf16.mxu0 0
  %666 = vmatpush1.bf16.msra.mxu0 0
  %667 = vmatprep.subr.bf16.mxu0 0
  %668 = vmatpush1.bf16.msra.mxu0 0
  %669 = vmatprep.subr.bf16.mxu0 0
  %670 = vmatpush1.bf16.msra.mxu0 0
  %671 = vmatprep.subr.bf16.mxu0 0
  %672 = vmatpush1.bf16.msra.mxu0 0
  %673 = vmatprep.subr.bf16.mxu0 0
  %674 = vmatpush1.bf16.msra.mxu0 0
  %675 = vmatprep.subr.bf16.mxu0 0
  %676 = vmatpush1.bf16.msra.mxu0 0
  %677 = vmatprep.subr.bf16.mxu0 0
  %678 = vmatpush1.bf16.msra.mxu0 0
  %679 = vmatprep.mubr.bf16.mxu0 0
  %680 = vmatmul.mubr.bf16.gmra.mrb[0].mxu0 %v600
  %v681 = vpop.f32.mrb[0].mxu0
  %v682 = vadd.f32 %v641, %v681
  %v683 = vpop.f32.mrb[0].mxu0
  %v684 = vpop.f32.mrb[0].mxu0
  %v685 = vadd.f32 %v644, %v684
  %v686 = vpop.f32.mrb[0].mxu0
  %687 = vdwg.mxu0
  %v688 = vrcp.pop %v682
  %v689 = vrcp.pop %v685
  %v690 = vmul.f32 %v598, %v688
  %v691 = vmul.f32 %v599, %v689
  %v692 = vadd.f32 %v690, %v691
  %v693 = vrot.slane %v692, 4
  %v694 = vadd.f32 %v692, %v693
  %v695 = vrot.slane %v694, 2
  %v696 = vadd.f32 %v694, %v695
  %v697 = vrot.slane %v696, 1
  %v698 = vadd.f32 %v696, %v697
  %v699 = vrcp.pop %v698
  %v700 = vmul.f32 %v690, %v699
  %v701 = vmul.f32 %v691, %v699
  %v702 = vpack.c.bf16 %v701, %v700
  %v703 = vunpack.c.l.bf16 %v702
  %v704 = vunpack.c.h.bf16 %v702
  %v705 = vsub.f32 %v700, %v703
  %v706 = vsub.f32 %v701, %v704
  %v707 = vpack.c.bf16 %v706, %v705
  %708 = vmatprep.subr.bf16.mxu0 0
  %709 = vmatpush1.bf16.msra.mxu0 %v80
  %710 = vmatprep.subr.bf16.mxu0 0
  %711 = vmatpush1.bf16.msra.mxu0 %v81
  %712 = vmatprep.subr.bf16.mxu0 0
  %713 = vmatpush1.bf16.msra.mxu0 %v82
  %714 = vmatprep.subr.bf16.mxu0 0
  %715 = vmatpush1.bf16.msra.mxu0 %v83
  %716 = vmatprep.subr.bf16.mxu0 0
  %717 = vmatpush1.bf16.msra.mxu0 %v84
  %718 = vmatprep.subr.bf16.mxu0 0
  %719 = vmatpush1.bf16.msra.mxu0 %v85
  %720 = vmatprep.subr.bf16.mxu0 0
  %721 = vmatpush1.bf16.msra.mxu0 %v86
  %722 = vmatprep.subr.bf16.mxu0 0
  %723 = vmatpush1.bf16.msra.mxu0 %v87
  %724 = vmatprep.subr.bf16.mxu0 0
  %725 = vmatpush1.bf16.msra.mxu0 0
  %726 = vmatprep.subr.bf16.mxu0 0
  %727 = vmatpush1.bf16.msra.mxu0 0
  %728 = vmatprep.subr.bf16.mxu0 0
  %729 = vmatpush1.bf16.msra.mxu0 0
  %730 = vmatprep.subr.bf16.mxu0 0
  %731 = vmatpush1.bf16.msra.mxu0 0
  %732 = vmatprep.subr.bf16.mxu0 0
  %733 = vmatpush1.bf16.msra.mxu0 0
  %734 = vmatprep.subr.bf16.mxu0 0
  %735 = vmatpush1.bf16.msra.mxu0 0
  %736 = vmatprep.subr.bf16.mxu0 0
  %737 = vmatpush1.bf16.msra.mxu0 0
  %738 = vmatprep.subr.bf16.mxu0 0
  %739 = vmatpush1.bf16.msra.mxu0 0
  %740 = vmatprep.mubr.bf16.mxu0 0
  %741 = vmatmul.mubr.bf16.gmra.mrb[0].mxu0 %v707
  %v742 = vpop.f32.mrb[0].mxu0
  %v743 = vadd.f32 0.0, %v742
  %v744 = vpop.f32.mrb[0].mxu0
  %v745 = vpop.f32.mrb[0].mxu0
  %v746 = vadd.f32 0.0, %v745
  %v747 = vpop.f32.mrb[0].mxu0
  %748 = vdwg.mxu0
  %749 = vmatprep.subr.bf16.mxu0 0
  %750 = vmatpush1.bf16.msra.mxu0 %v80
  %751 = vmatprep.subr.bf16.mxu0 0
  %752 = vmatpush1.bf16.msra.mxu0 %v81
  %753 = vmatprep.subr.bf16.mxu0 0
  %754 = vmatpush1.bf16.msra.mxu0 %v82
  %755 = vmatprep.subr.bf16.mxu0 0
  %756 = vmatpush1.bf16.msra.mxu0 %v83
  %757 = vmatprep.subr.bf16.mxu0 0
  %758 = vmatpush1.bf16.msra.mxu0 %v84
  %759 = vmatprep.subr.bf16.mxu0 0
  %760 = vmatpush1.bf16.msra.mxu0 %v85
  %761 = vmatprep.subr.bf16.mxu0 0
  %762 = vmatpush1.bf16.msra.mxu0 %v86
  %763 = vmatprep.subr.bf16.mxu0 0
  %764 = vmatpush1.bf16.msra.mxu0 %v87
  %765 = vmatprep.subr.bf16.mxu0 0
  %766 = vmatpush1.bf16.msra.mxu0 0
  %767 = vmatprep.subr.bf16.mxu0 0
  %768 = vmatpush1.bf16.msra.mxu0 0
  %769 = vmatprep.subr.bf16.mxu0 0
  %770 = vmatpush1.bf16.msra.mxu0 0
  %771 = vmatprep.subr.bf16.mxu0 0
  %772 = vmatpush1.bf16.msra.mxu0 0
  %773 = vmatprep.subr.bf16.mxu0 0
  %774 = vmatpush1.bf16.msra.mxu0 0
  %775 = vmatprep.subr.bf16.mxu0 0
  %776 = vmatpush1.bf16.msra.mxu0 0
  %777 = vmatprep.subr.bf16.mxu0 0
  %778 = vmatpush1.bf16.msra.mxu0 0
  %779 = vmatprep.subr.bf16.mxu0 0
  %780 = vmatpush1.bf16.msra.mxu0 0
  %781 = vmatprep.mubr.bf16.mxu0 0
  %782 = vmatmul.mubr.bf16.gmra.mrb[0].mxu0 %v702
  %v783 = vpop.f32.mrb[0].mxu0
  %v784 = vadd.f32 %v743, %v783
  %v785 = vpop.f32.mrb[0].mxu0
  %v786 = vpop.f32.mrb[0].mxu0
  %v787 = vadd.f32 %v746, %v786
  %v788 = vpop.f32.mrb[0].mxu0
  %789 = vdwg.mxu0
  %v790 = vrcp.pop %v784
  %v791 = vrcp.pop %v787
  %v792 = vmul.f32 %v700, %v790
  %v793 = vmul.f32 %v701, %v791
  %v794 = vadd.f32 %v792, %v793
  %v795 = vrot.slane %v794, 4
  %v796 = vadd.f32 %v794, %v795
  %v797 = vrot.slane %v796, 2
  %v798 = vadd.f32 %v796, %v797
  %v799 = vrot.slane %v798, 1
  %v800 = vadd.f32 %v798, %v799
  %v801 = vrcp.pop %v800
  %v802 = vmul.f32 %v792, %v801
  %v803 = vmul.f32 %v793, %v801
  %v804 = vpack.c.bf16 %v803, %v802
  %v805 = vunpack.c.l.bf16 %v804
  %v806 = vunpack.c.h.bf16 %v804
  %v807 = vsub.f32 %v802, %v805
  %v808 = vsub.f32 %v803, %v806
  %v809 = vpack.c.bf16 %v808, %v807
  %810 = vmatprep.subr.bf16.mxu0 0
  %811 = vmatpush1.bf16.msra.mxu0 %v80
  %812 = vmatprep.subr.bf16.mxu0 0
  %813 = vmatpush1.bf16.msra.mxu0 %v81
  %814 = vmatprep.subr.bf16.mxu0 0
  %815 = vmatpush1.bf16.msra.mxu0 %v82
  %816 = vmatprep.subr.bf16.mxu0 0
  %817 = vmatpush1.bf16.msra.mxu0 %v83
  %818 = vmatprep.subr.bf16.mxu0 0
  %819 = vmatpush1.bf16.msra.mxu0 %v84
  %820 = vmatprep.subr.bf16.mxu0 0
  %821 = vmatpush1.bf16.msra.mxu0 %v85
  %822 = vmatprep.subr.bf16.mxu0 0
  %823 = vmatpush1.bf16.msra.mxu0 %v86
  %824 = vmatprep.subr.bf16.mxu0 0
  %825 = vmatpush1.bf16.msra.mxu0 %v87
  %826 = vmatprep.subr.bf16.mxu0 0
  %827 = vmatpush1.bf16.msra.mxu0 0
  %828 = vmatprep.subr.bf16.mxu0 0
  %829 = vmatpush1.bf16.msra.mxu0 0
  %830 = vmatprep.subr.bf16.mxu0 0
  %831 = vmatpush1.bf16.msra.mxu0 0
  %832 = vmatprep.subr.bf16.mxu0 0
  %833 = vmatpush1.bf16.msra.mxu0 0
  %834 = vmatprep.subr.bf16.mxu0 0
  %835 = vmatpush1.bf16.msra.mxu0 0
  %836 = vmatprep.subr.bf16.mxu0 0
  %837 = vmatpush1.bf16.msra.mxu0 0
  %838 = vmatprep.subr.bf16.mxu0 0
  %839 = vmatpush1.bf16.msra.mxu0 0
  %840 = vmatprep.subr.bf16.mxu0 0
  %841 = vmatpush1.bf16.msra.mxu0 0
  %842 = vmatprep.mubr.bf16.mxu0 0
  %843 = vmatmul.mubr.bf16.gmra.mrb[0].mxu0 %v809
  %v844 = vpop.f32.mrb[0].mxu0
  %v845 = vadd.f32 0.0, %v844
  %v846 = vpop.f32.mrb[0].mxu0
  %v847 = vpop.f32.mrb[0].mxu0
  %v848 = vadd.f32 0.0, %v847
  %v849 = vpop.f32.mrb[0].mxu0
  %850 = vdwg.mxu0
  %851 = vmatprep.subr.bf16.mxu0 0
  %852 = vmatpush1.bf16.msra.mxu0 %v80
  %853 = vmatprep.subr.bf16.mxu0 0
  %854 = vmatpush1.bf16.msra.mxu0 %v81
  %855 = vmatprep.subr.bf16.mxu0 0
  %856 = vmatpush1.bf16.msra.mxu0 %v82
  %857 = vmatprep.subr.bf16.mxu0 0
  %858 = vmatpush1.bf16.msra.mxu0 %v83
  %859 = vmatprep.subr.bf16.mxu0 0
  %860 = vmatpush1.bf16.msra.mxu0 %v84
  %861 = vmatprep.subr.bf16.mxu0 0
  %862 = vmatpush1.bf16.msra.mxu0 %v85
  %863 = vmatprep.subr.bf16.mxu0 0
  %864 = vmatpush1.bf16.msra.mxu0 %v86
  %865 = vmatprep.subr.bf16.mxu0 0
  %866 = vmatpush1.bf16.msra.mxu0 %v87
  %867 = vmatprep.subr.bf16.mxu0 0
  %868 = vmatpush1.bf16.msra.mxu0 0
  %869 = vmatprep.subr.bf16.mxu0 0
  %870 = vmatpush1.bf16.msra.mxu0 0
  %871 = vmatprep.subr.bf16.mxu0 0
  %872 = vmatpush1.bf16.msra.mxu0 0
  %873 = vmatprep.subr.bf16.mxu0 0
  %874 = vmatpush1.bf16.msra.mxu0 0
  %875 = vmatprep.subr.bf16.mxu0 0
  %876 = vmatpush1.bf16.msra.mxu0 0
  %877 = vmatprep.subr.bf16.mxu0 0
  %878 = vmatpush1.bf16.msra.mxu0 0
  %879 = vmatprep.subr.bf16.mxu0 0
  %880 = vmatpush1.bf16.msra.mxu0 0
  %881 = vmatprep.subr.bf16.mxu0 0
  %882 = vmatpush1.bf16.msra.mxu0 0
  %883 = vmatprep.mubr.bf16.mxu0 0
  %884 = vmatmul.mubr.bf16.gmra.mrb[0].mxu0 %v804
  %v885 = vpop.f32.mrb[0].mxu0
  %v886 = vadd.f32 %v845, %v885
  %v887 = vpop.f32.mrb[0].mxu0
  %v888 = vpop.f32.mrb[0].mxu0
  %v889 = vadd.f32 %v848, %v888
  %v890 = vpop.f32.mrb[0].mxu0
  %891 = vdwg.mxu0
  %v892 = vrcp.pop %v886
  %v893 = vrcp.pop %v889
  %v894 = vmul.f32 %v802, %v892
  %v895 = vmul.f32 %v803, %v893
  %v896 = vadd.f32 %v894, %v895
  %v897 = vrot.slane %v896, 4
  %v898 = vadd.f32 %v896, %v897
  %v899 = vrot.slane %v898, 2
  %v900 = vadd.f32 %v898, %v899
  %v901 = vrot.slane %v900, 1
  %v902 = vadd.f32 %v900, %v901
  %v903 = vrcp.pop %v902
  %v904 = vmul.f32 %v894, %v903
  %v905 = vmul.f32 %v895, %v903
  %v906 = vpack.c.bf16 %v905, %v904
  %v907 = vunpack.c.l.bf16 %v906
  %v908 = vunpack.c.h.bf16 %v906
  %v909 = vsub.f32 %v904, %v907
  %v910 = vsub.f32 %v905, %v908
  %v911 = vpack.c.bf16 %v910, %v909
  %912 = vmatprep.subr.bf16.mxu0 0
  %913 = vmatpush1.bf16.msra.mxu0 %v80
  %914 = vmatprep.subr.bf16.mxu0 0
  %915 = vmatpush1.bf16.msra.mxu0 %v81
  %916 = vmatprep.subr.bf16.mxu0 0
  %917 = vmatpush1.bf16.msra.mxu0 %v82
  %918 = vmatprep.subr.bf16.mxu0 0
  %919 = vmatpush1.bf16.msra.mxu0 %v83
  %920 = vmatprep.subr.bf16.mxu0 0
  %921 = vmatpush1.bf16.msra.mxu0 %v84
  %922 = vmatprep.subr.bf16.mxu0 0
  %923 = vmatpush1.bf16.msra.mxu0 %v85
  %924 = vmatprep.subr.bf16.mxu0 0
  %925 = vmatpush1.bf16.msra.mxu0 %v86
  %926 = vmatprep.subr.bf16.mxu0 0
  %927 = vmatpush1.bf16.msra.mxu0 %v87
  %928 = vmatprep.subr.bf16.mxu0 0
  %929 = vmatpush1.bf16.msra.mxu0 0
  %930 = vmatprep.subr.bf16.mxu0 0
  %931 = vmatpush1.bf16.msra.mxu0 0
  %932 = vmatprep.subr.bf16.mxu0 0
  %933 = vmatpush1.bf16.msra.mxu0 0
  %934 = vmatprep.subr.bf16.mxu0 0
  %935 = vmatpush1.bf16.msra.mxu0 0
  %936 = vmatprep.subr.bf16.mxu0 0
  %937 = vmatpush1.bf16.msra.mxu0 0
  %938 = vmatprep.subr.bf16.mxu0 0
  %939 = vmatpush1.bf16.msra.mxu0 0
  %940 = vmatprep.subr.bf16.mxu0 0
  %941 = vmatpush1.bf16.msra.mxu0 0
  %942 = vmatprep.subr.bf16.mxu0 0
  %943 = vmatpush1.bf16.msra.mxu0 0
  %944 = vmatprep.mubr.bf16.mxu0 0
  %945 = vmatmul.mubr.bf16.gmra.mrb[0].mxu0 %v911
  %v946 = vpop.f32.mrb[0].mxu0
  %v947 = vadd.f32 0.0, %v946
  %v948 = vpop.f32.mrb[0].mxu0
  %v949 = vpop.f32.mrb[0].mxu0
  %v950 = vadd.f32 0.0, %v949
  %v951 = vpop.f32.mrb[0].mxu0
  %952 = vdwg.mxu0
  %953 = vmatprep.subr.bf16.mxu0 0
  %954 = vmatpush1.bf16.msra.mxu0 %v80
  %955 = vmatprep.subr.bf16.mxu0 0
  %956 = vmatpush1.bf16.msra.mxu0 %v81
  %957 = vmatprep.subr.bf16.mxu0 0
  %958 = vmatpush1.bf16.msra.mxu0 %v82
  %959 = vmatprep.subr.bf16.mxu0 0
  %960 = vmatpush1.bf16.msra.mxu0 %v83
  %961 = vmatprep.subr.bf16.mxu0 0
  %962 = vmatpush1.bf16.msra.mxu0 %v84
  %963 = vmatprep.subr.bf16.mxu0 0
  %964 = vmatpush1.bf16.msra.mxu0 %v85
  %965 = vmatprep.subr.bf16.mxu0 0
  %966 = vmatpush1.bf16.msra.mxu0 %v86
  %967 = vmatprep.subr.bf16.mxu0 0
  %968 = vmatpush1.bf16.msra.mxu0 %v87
  %969 = vmatprep.subr.bf16.mxu0 0
  %970 = vmatpush1.bf16.msra.mxu0 0
  %971 = vmatprep.subr.bf16.mxu0 0
  %972 = vmatpush1.bf16.msra.mxu0 0
  %973 = vmatprep.subr.bf16.mxu0 0
  %974 = vmatpush1.bf16.msra.mxu0 0
  %975 = vmatprep.subr.bf16.mxu0 0
  %976 = vmatpush1.bf16.msra.mxu0 0
  %977 = vmatprep.subr.bf16.mxu0 0
  %978 = vmatpush1.bf16.msra.mxu0 0
  %979 = vmatprep.subr.bf16.mxu0 0
  %980 = vmatpush1.bf16.msra.mxu0 0
  %981 = vmatprep.subr.bf16.mxu0 0
  %982 = vmatpush1.bf16.msra.mxu0 0
  %983 = vmatprep.subr.bf16.mxu0 0
  %984 = vmatpush1.bf16.msra.mxu0 0
  %985 = vmatprep.mubr.bf16.mxu0 0
  %986 = vmatmul.mubr.bf16.gmra.mrb[0].mxu0 %v906
  %v987 = vpop.f32.mrb[0].mxu0
  %v988 = vadd.f32 %v947, %v987
  %v989 = vpop.f32.mrb[0].mxu0
  %v990 = vpop.f32.mrb[0].mxu0
  %v991 = vadd.f32 %v950, %v990
  %v992 = vpop.f32.mrb[0].mxu0
  %993 = vdwg.mxu0
  %v994 = vrcp.pop %v988
  %v995 = vrcp.pop %v991
  %v996 = vmul.f32 %v904, %v994
  %v997 = vmul.f32 %v905, %v995
  %v998 = vadd.f32 %v996, %v997
  %v999 = vrot.slane %v998, 4
  %v1000 = vadd.f32 %v998, %v999
  %v1001 = vrot.slane %v1000, 2
  %v1002 = vadd.f32 %v1000, %v1001
  %v1003 = vrot.slane %v1002, 1
  %v1004 = vadd.f32 %v1002, %v1003
  %v1005 = vrcp.pop %v1004
  %v1006 = vmul.f32 %v996, %v1005
  %v1007 = vmul.f32 %v997, %v1005
  %v1008 = vpack.c.bf16 %v1007, %v1006
  %v1009 = vunpack.c.l.bf16 %v1008
  %v1010 = vunpack.c.h.bf16 %v1008
  %v1011 = vsub.f32 %v1006, %v1009
  %v1012 = vsub.f32 %v1007, %v1010
  %v1013 = vpack.c.bf16 %v1012, %v1011
  %1014 = vmatprep.subr.bf16.mxu0 0
  %1015 = vmatpush1.bf16.msra.mxu0 %v80
  %1016 = vmatprep.subr.bf16.mxu0 0
  %1017 = vmatpush1.bf16.msra.mxu0 %v81
  %1018 = vmatprep.subr.bf16.mxu0 0
  %1019 = vmatpush1.bf16.msra.mxu0 %v82
  %1020 = vmatprep.subr.bf16.mxu0 0
  %1021 = vmatpush1.bf16.msra.mxu0 %v83
  %1022 = vmatprep.subr.bf16.mxu0 0
  %1023 = vmatpush1.bf16.msra.mxu0 %v84
  %1024 = vmatprep.subr.bf16.mxu0 0
  %1025 = vmatpush1.bf16.msra.mxu0 %v85
  %1026 = vmatprep.subr.bf16.mxu0 0
  %1027 = vmatpush1.bf16.msra.mxu0 %v86
  %1028 = vmatprep.subr.bf16.mxu0 0
  %1029 = vmatpush1.bf16.msra.mxu0 %v87
  %1030 = vmatprep.subr.bf16.mxu0 0
  %1031 = vmatpush1.bf16.msra.mxu0 0
  %1032 = vmatprep.subr.bf16.mxu0 0
  %1033 = vmatpush1.bf16.msra.mxu0 0
  %1034 = vmatprep.subr.bf16.mxu0 0
  %1035 = vmatpush1.bf16.msra.mxu0 0
  %1036 = vmatprep.subr.bf16.mxu0 0
  %1037 = vmatpush1.bf16.msra.mxu0 0
  %1038 = vmatprep.subr.bf16.mxu0 0
  %1039 = vmatpush1.bf16.msra.mxu0 0
  %1040 = vmatprep.subr.bf16.mxu0 0
  %1041 = vmatpush1.bf16.msra.mxu0 0
  %1042 = vmatprep.subr.bf16.mxu0 0
  %1043 = vmatpush1.bf16.msra.mxu0 0
  %1044 = vmatprep.subr.bf16.mxu0 0
  %1045 = vmatpush1.bf16.msra.mxu0 0
  %1046 = vmatprep.mubr.bf16.mxu0 0
  %1047 = vmatmul.mubr.bf16.gmra.mrb[0].mxu0 %v1013
  %v1048 = vpop.f32.mrb[0].mxu0
  %v1049 = vadd.f32 0.0, %v1048
  %v1050 = vpop.f32.mrb[0].mxu0
  %v1051 = vpop.f32.mrb[0].mxu0
  %v1052 = vadd.f32 0.0, %v1051
  %v1053 = vpop.f32.mrb[0].mxu0
  %1054 = vdwg.mxu0
  %1055 = vmatprep.subr.bf16.mxu0 0
  %1056 = vmatpush1.bf16.msra.mxu0 %v80
  %1057 = vmatprep.subr.bf16.mxu0 0
  %1058 = vmatpush1.bf16.msra.mxu0 %v81
  %1059 = vmatprep.subr.bf16.mxu0 0
  %1060 = vmatpush1.bf16.msra.mxu0 %v82
  %1061 = vmatprep.subr.bf16.mxu0 0
  %1062 = vmatpush1.bf16.msra.mxu0 %v83
  %1063 = vmatprep.subr.bf16.mxu0 0
  %1064 = vmatpush1.bf16.msra.mxu0 %v84
  %1065 = vmatprep.subr.bf16.mxu0 0
  %1066 = vmatpush1.bf16.msra.mxu0 %v85
  %1067 = vmatprep.subr.bf16.mxu0 0
  %1068 = vmatpush1.bf16.msra.mxu0 %v86
  %1069 = vmatprep.subr.bf16.mxu0 0
  %1070 = vmatpush1.bf16.msra.mxu0 %v87
  %1071 = vmatprep.subr.bf16.mxu0 0
  %1072 = vmatpush1.bf16.msra.mxu0 0
  %1073 = vmatprep.subr.bf16.mxu0 0
  %1074 = vmatpush1.bf16.msra.mxu0 0
  %1075 = vmatprep.subr.bf16.mxu0 0
  %1076 = vmatpush1.bf16.msra.mxu0 0
  %1077 = vmatprep.subr.bf16.mxu0 0
  %1078 = vmatpush1.bf16.msra.mxu0 0
  %1079 = vmatprep.subr.bf16.mxu0 0
  %1080 = vmatpush1.bf16.msra.mxu0 0
  %1081 = vmatprep.subr.bf16.mxu0 0
  %1082 = vmatpush1.bf16.msra.mxu0 0
  %1083 = vmatprep.subr.bf16.mxu0 0
  %1084 = vmatpush1.bf16.msra.mxu0 0
  %1085 = vmatprep.subr.bf16.mxu0 0
  %1086 = vmatpush1.bf16.msra.mxu0 0
  %1087 = vmatprep.mubr.bf16.mxu0 0
  %1088 = vmatmul.mubr.bf16.gmra.mrb[0].mxu0 %v1008
  %v1089 = vpop.f32.mrb[0].mxu0
  %v1090 = vadd.f32 %v1049, %v1089
  %v1091 = vpop.f32.mrb[0].mxu0
  %v1092 = vpop.f32.mrb[0].mxu0
  %v1093 = vadd.f32 %v1052, %v1092
  %v1094 = vpop.f32.mrb[0].mxu0
  %1095 = vdwg.mxu0
  %v1096 = vrcp.pop %v1090
  %v1097 = vmul.f32 %v1006, %v1096
  %v1098 = vrcp.pop %v1093
  %v1099 = vmul.f32 %v1007, %v1098
  %1100 = vst [vmem:[%s2] sm:$0xff] %v1097
  %1101 = vst [vmem:[%s2 + $0x8] sm:$0xff] %v1099
  // Predicated region
  $region10: #{sinkhorn_forward.1} parent=0 // pred_check
    _
  $region11: #{sinkhorn_forward.1} parent=0 // pred_check_branch
    %1103 = sbr.rel (0) target = $region13
  $region12: #{sinkhorn_forward.1} parent=0 // pred_region
    _
  $region13: #{sinkhorn_forward.1} parent=0 // pred_fallthru
    _
  // Predicated region
  $region14: #{sinkhorn_forward.1} parent=0 // pred_check
    _
  $region15: #{sinkhorn_forward.1} parent=0 // pred_check_branch
    %1105 = sbr.rel (0) target = $region17
  $region16: #{sinkhorn_forward.1} parent=0 // pred_region
    _
  $region17: #{sinkhorn_forward.1} parent=0 // pred_fallthru
    _

</llo_original>
